<compile_context>
chip_gen: v5e
topology: v5e:2x2
jax: 0.10.0
libtpu: 0.0.40
codegen_flags: <defaults>
</compile_context>

<pallas_src>
import functools

import jax
import jax.numpy as jnp
from jax.experimental import pallas as pl
from jax.experimental.pallas import tpu as pltpu

C1 = 0.01 ** 2
C2 = 0.03 ** 2
_LANES = 128
# Rough per-step VMEM model: 2 inputs x 2 pipeline buffers + f32 casts + pooled maps
# + SSIM temporaries, all of roughly (TH+2, W+2, 128) f32.
_F32_MAPS = 14


def _ssim_kernel(x_ref, y_ref, out_ref, *, TH, W):
    """x_ref/y_ref: (1, TH+2, W+2, 128) reflection-padded row strips, one (image, strip)
    per lane.  out_ref: (1, 1, 128) per-lane partial sums of the clamped SSIM loss."""
    # TODO(synk): for bf16 inputs at very large tiles, cast per-consumer instead of
    # eagerly to avoid pinning two extra f32 tiles for the whole body.
    xp = x_ref[0].astype(jnp.float32)   # (TH+2, W+2, 128)
    yp = y_ref[0].astype(jnp.float32)

    def pool_sum(a):
        # Separable 3x3 *sum* pool (the 1/9 is folded into the constants below).
        # Vertical 3-tap: leading-dim slices (pure address offsets).
        v = a[0:TH] + a[1:TH + 1] + a[2:TH + 2]
        # Horizontal 3-tap on the already-reduced map.
        # TODO(synk): if the bundle dump shows materialized shifted copies here, switch
        # to pltpu.roll(v, Wp-1 / Wp-2, axis=1) + a single [:, :W] slice (XLU slot).
        return v[:, 0:W] + v[:, 1:W + 1] + v[:, 2:W + 2]       # (TH, W, 128)

    sx = pool_sum(xp)
    sy = pool_sum(yp)
    sxx = pool_sum(xp * xp)
    syy = pool_sum(yp * yp)
    sxy = pool_sum(xp * yp)

    # SSIM with the 3x3 mean's 1/9 folded into the constants (n/d is invariant):
    #   mu = s/9, sigma = sq/9 - mu^2  ->  scale C1, C2 by 81 and cross terms by 9.
    pxy = sx * sy
    px2 = sx * sx
    py2 = sy * sy
    n = (2.0 * pxy + 81.0 * C1) * (18.0 * sxy - 2.0 * pxy + 81.0 * C2)
    d = (px2 + py2 + 81.0 * C1) * (9.0 * (sxx + syy) - px2 - py2 + 81.0 * C2)

    # 1/d on the (otherwise idle) EUP instead of a VALU divide chain.
    val = jnp.clip(0.5 - 0.5 * n * pl.reciprocal(d, approx=False), 0.0, 1.0)

    # Leading-axis reduce = plain VALU slab adds; only the small (W, 128) map needs the
    # cross-sublane (XLU) reduction.
    col = jnp.sum(val, axis=0)                                   # (W, 128)
    out_ref[...] = jnp.sum(col, axis=0, keepdims=True)[None]     # (1, 1, 128)


def _choose_strip_height(H, NC, Wp, lanes, vmem_budget):
    """Pick strip height TH (divisor of H): (a) the ~_F32_MAPS f32 tiles of
    (TH+2, Wp, lanes) must fit the VMEM budget; (b) prefer NC * (H // TH) >= lanes so
    small batches still fill all 128 lanes (more strips per image)."""
    def step_bytes(th):
        return _F32_MAPS * (th + 2) * Wp * lanes * 4

    divs = [d for d in range(1, H + 1) if H % d == 0]
    fits = [d for d in divs if step_bytes(d) <= vmem_budget] or [1]
    occ = [d for d in fits if NC * (H // d) >= lanes]
    th = max(occ) if occ else min(fits)
    return th, step_bytes(th)


def ssim_loss(x, y, *, lanes=_LANES):
    """SSIM loss identical to the PyTorch SSIM module's forward. x, y: (N, C, H, W)."""
    N, C, H, W = x.shape
    NC = N * C
    Wp = W + 2

    # Per-generation VMEM capacity (v5e/v6e: 128 MiB, v7x: 64 MiB physical).
    try:
        vmem_cap = int(pltpu.get_tpu_info().vmem_capacity_bytes)
    except Exception:
        vmem_cap = 64 * 1024 * 1024
    TH, need = _choose_strip_height(H, NC, Wp, lanes, (vmem_cap * 3) // 4)
    THp = TH + 2
    G = H // TH                       # row strips per image (2-row reflective halo each)
    units = NC * G                    # one lane per (image, strip)
    B = pl.cdiv(units, lanes) * lanes
    nblocks = B // lanes
    vmem_limit = int(min(max(need + (4 << 20), 32 << 20), (vmem_cap * 9) // 10))

    # TODO(synk): fuse the reflect-pad / strip gather / transpose into the kernel (build
    # the 1-pixel halo from unpadded (H, W, lanes) blocks in VMEM scratch) to cut the
    # wrapper-side HBM round trips, which matter most on v5e.
    def to_blocks(a):
        a = a.reshape(NC, H, W)
        ap = jnp.pad(a, ((0, 0), (1, 1), (1, 1)), mode="reflect")        # (NC, H+2, W+2)
        # Overlapping row windows: strip g covers padded rows [g*TH, g*TH + TH + 2).
        rows = jnp.arange(G)[:, None] * TH + jnp.arange(THp)[None, :]    # (G, THp)
        s = ap[:, rows]                                                  # (NC, G, THp, Wp)
        s = s.reshape(units, THp, Wp)
        s = jnp.pad(s, ((0, B - units), (0, 0), (0, 0)))                 # zero pad lanes
        # Contiguous per-step DMA blocks: (nblocks, THp, Wp, lanes), batch on lanes.
        return jnp.transpose(s.reshape(nblocks, lanes, THp, Wp), (0, 2, 3, 1))

    xb = to_blocks(x)
    yb = to_blocks(y)

    partial = pl.pallas_call(
        functools.partial(_ssim_kernel, TH=TH, W=W),
        out_shape=jax.ShapeDtypeStruct((nblocks, 1, lanes), jnp.float32),
        grid=(nblocks,),
        in_specs=[
            pl.BlockSpec((1, THp, Wp, lanes), lambda i: (i, 0, 0, 0)),
            pl.BlockSpec((1, THp, Wp, lanes), lambda i: (i, 0, 0, 0)),
        ],
        out_specs=pl.BlockSpec((1, 1, lanes), lambda i: (i, 0, 0)),
        compiler_params=pltpu.CompilerParams(
            dimension_semantics=("parallel",),
            vmem_limit_bytes=vmem_limit,
        ),
    )(xb, yb)

    # Only valid (image, strip) lanes contribute; zero-padded lanes are excluded exactly.
    return jnp.sum(partial.reshape(-1)[:units])


def _ssim_loss_ref(x, y):
    """Pure-JAX reference mirroring the PyTorch module."""
    xp = jnp.pad(x, ((0, 0), (0, 0), (1, 1), (1, 1)), mode="reflect").astype(jnp.float32)
    yp = jnp.pad(y, ((0, 0), (0, 0), (1, 1), (1, 1)), mode="reflect").astype(jnp.float32)
    H, W = x.shape[2], x.shape[3]

    def pool(a):
        s = jnp.zeros(a.shape[:2] + (H, W), jnp.float32)
        for di in range(3):
            for dj in range(3):
                s = s + a[:, :, di:di + H, dj:dj + W]
        return s / 9.0

    mu_x, mu_y = pool(xp), pool(yp)
    sigma_x = pool(xp * xp) - mu_x * mu_x
    sigma_y = pool(yp * yp) - mu_y * mu_y
    sigma_xy = pool(xp * yp) - mu_x * mu_y
    n = (2 * mu_x * mu_y + C1) * (2 * sigma_xy + C2)
    d = (mu_x ** 2 + mu_y ** 2 + C1) * (sigma_x + sigma_y + C2)
    return jnp.sum(jnp.clip((1 - n / d) / 2, 0.0, 1.0))


if __name__ == "__main__":
    key = jax.random.PRNGKey(0)
    k1, k2 = jax.random.split(key)
    N, C, H, W = 2, 4, 16, 16
    x = jax.random.uniform(k1, (N, C, H, W), dtype=jnp.float32)
    y = jax.random.uniform(k2, (N, C, H, W), dtype=jnp.float32)

    out = jax.block_until_ready(ssim_loss(x, y))
    ref = jax.block_until_ready(_ssim_loss_ref(x, y))
    assert jnp.allclose(out, ref, rtol=1e-5, atol=1e-5), (out, ref)
    print("KERNEL_OK")
</pallas_src>

<mosaic_0001>
module attributes {stable_mosaic.version = 11 : i64} {
  func.func @_ssim_kernel(%arg0: i32, %arg1: memref<1x3x18x128xf32, #tpu.memory_space<vmem>>, %arg2: memref<1x3x18x128xf32, #tpu.memory_space<vmem>>, %arg3: memref<1x1x128xf32, #tpu.memory_space<vmem>>) attributes {dimension_semantics = [#tpu.dimension_semantics<parallel>], iteration_bounds = array<i64: 1>, scalar_prefetch = 0 : i64, scratch_operands = 0 : i64, tpu.core_type = #tpu.core_type<tc>, window_params = [{transform_indices = @transform_0, window_bounds = array<i64: 1, 3, 18, 128>}, {transform_indices = @transform_1, window_bounds = array<i64: 1, 3, 18, 128>}, {transform_indices = @transform_2, window_bounds = array<i64: 1, 1, 128>}]} {
    %c0 = arith.constant 0 : index
    %c0_0 = arith.constant 0 : index
    %c0_1 = arith.constant 0 : index
    %c0_2 = arith.constant 0 : index
    %0 = vector.load %arg1[%c0, %c0_0, %c0_1, %c0_2] : memref<1x3x18x128xf32, #tpu.memory_space<vmem>>, vector<1x3x18x128xf32>
    %1 = vector.shape_cast %0 : vector<1x3x18x128xf32> to vector<3x18x128xf32>
    %c0_3 = arith.constant 0 : index
    %c0_4 = arith.constant 0 : index
    %c0_5 = arith.constant 0 : index
    %c0_6 = arith.constant 0 : index
    %2 = vector.load %arg2[%c0_3, %c0_4, %c0_5, %c0_6] : memref<1x3x18x128xf32, #tpu.memory_space<vmem>>, vector<1x3x18x128xf32>
    %3 = vector.shape_cast %2 : vector<1x3x18x128xf32> to vector<3x18x128xf32>
    %4 = vector.extract_strided_slice %1 {offsets = [0, 0, 0], sizes = [1, 18, 128], strides = [1, 1, 1]} : vector<3x18x128xf32> to vector<1x18x128xf32>
    %5 = vector.extract_strided_slice %1 {offsets = [1, 0, 0], sizes = [1, 18, 128], strides = [1, 1, 1]} : vector<3x18x128xf32> to vector<1x18x128xf32>
    %6 = arith.addf %4, %5 : vector<1x18x128xf32>
    %7 = vector.extract_strided_slice %1 {offsets = [2, 0, 0], sizes = [1, 18, 128], strides = [1, 1, 1]} : vector<3x18x128xf32> to vector<1x18x128xf32>
    %8 = arith.addf %6, %7 : vector<1x18x128xf32>
    %9 = vector.extract_strided_slice %8 {offsets = [0, 0, 0], sizes = [1, 16, 128], strides = [1, 1, 1]} : vector<1x18x128xf32> to vector<1x16x128xf32>
    %10 = vector.extract_strided_slice %8 {offsets = [0, 1, 0], sizes = [1, 16, 128], strides = [1, 1, 1]} : vector<1x18x128xf32> to vector<1x16x128xf32>
    %11 = arith.addf %9, %10 : vector<1x16x128xf32>
    %12 = vector.extract_strided_slice %8 {offsets = [0, 2, 0], sizes = [1, 16, 128], strides = [1, 1, 1]} : vector<1x18x128xf32> to vector<1x16x128xf32>
    %13 = arith.addf %11, %12 : vector<1x16x128xf32>
    %14 = vector.extract_strided_slice %3 {offsets = [0, 0, 0], sizes = [1, 18, 128], strides = [1, 1, 1]} : vector<3x18x128xf32> to vector<1x18x128xf32>
    %15 = vector.extract_strided_slice %3 {offsets = [1, 0, 0], sizes = [1, 18, 128], strides = [1, 1, 1]} : vector<3x18x128xf32> to vector<1x18x128xf32>
    %16 = arith.addf %14, %15 : vector<1x18x128xf32>
    %17 = vector.extract_strided_slice %3 {offsets = [2, 0, 0], sizes = [1, 18, 128], strides = [1, 1, 1]} : vector<3x18x128xf32> to vector<1x18x128xf32>
    %18 = arith.addf %16, %17 : vector<1x18x128xf32>
    %19 = vector.extract_strided_slice %18 {offsets = [0, 0, 0], sizes = [1, 16, 128], strides = [1, 1, 1]} : vector<1x18x128xf32> to vector<1x16x128xf32>
    %20 = vector.extract_strided_slice %18 {offsets = [0, 1, 0], sizes = [1, 16, 128], strides = [1, 1, 1]} : vector<1x18x128xf32> to vector<1x16x128xf32>
    %21 = arith.addf %19, %20 : vector<1x16x128xf32>
    %22 = vector.extract_strided_slice %18 {offsets = [0, 2, 0], sizes = [1, 16, 128], strides = [1, 1, 1]} : vector<1x18x128xf32> to vector<1x16x128xf32>
    %23 = arith.addf %21, %22 : vector<1x16x128xf32>
    %24 = arith.mulf %1, %1 : vector<3x18x128xf32>
    %25 = vector.extract_strided_slice %24 {offsets = [0, 0, 0], sizes = [1, 18, 128], strides = [1, 1, 1]} : vector<3x18x128xf32> to vector<1x18x128xf32>
    %26 = vector.extract_strided_slice %24 {offsets = [1, 0, 0], sizes = [1, 18, 128], strides = [1, 1, 1]} : vector<3x18x128xf32> to vector<1x18x128xf32>
    %27 = arith.addf %25, %26 : vector<1x18x128xf32>
    %28 = vector.extract_strided_slice %24 {offsets = [2, 0, 0], sizes = [1, 18, 128], strides = [1, 1, 1]} : vector<3x18x128xf32> to vector<1x18x128xf32>
    %29 = arith.addf %27, %28 : vector<1x18x128xf32>
    %30 = vector.extract_strided_slice %29 {offsets = [0, 0, 0], sizes = [1, 16, 128], strides = [1, 1, 1]} : vector<1x18x128xf32> to vector<1x16x128xf32>
    %31 = vector.extract_strided_slice %29 {offsets = [0, 1, 0], sizes = [1, 16, 128], strides = [1, 1, 1]} : vector<1x18x128xf32> to vector<1x16x128xf32>
    %32 = arith.addf %30, %31 : vector<1x16x128xf32>
    %33 = vector.extract_strided_slice %29 {offsets = [0, 2, 0], sizes = [1, 16, 128], strides = [1, 1, 1]} : vector<1x18x128xf32> to vector<1x16x128xf32>
    %34 = arith.addf %32, %33 : vector<1x16x128xf32>
    %35 = arith.mulf %3, %3 : vector<3x18x128xf32>
    %36 = vector.extract_strided_slice %35 {offsets = [0, 0, 0], sizes = [1, 18, 128], strides = [1, 1, 1]} : vector<3x18x128xf32> to vector<1x18x128xf32>
    %37 = vector.extract_strided_slice %35 {offsets = [1, 0, 0], sizes = [1, 18, 128], strides = [1, 1, 1]} : vector<3x18x128xf32> to vector<1x18x128xf32>
    %38 = arith.addf %36, %37 : vector<1x18x128xf32>
    %39 = vector.extract_strided_slice %35 {offsets = [2, 0, 0], sizes = [1, 18, 128], strides = [1, 1, 1]} : vector<3x18x128xf32> to vector<1x18x128xf32>
    %40 = arith.addf %38, %39 : vector<1x18x128xf32>
    %41 = vector.extract_strided_slice %40 {offsets = [0, 0, 0], sizes = [1, 16, 128], strides = [1, 1, 1]} : vector<1x18x128xf32> to vector<1x16x128xf32>
    %42 = vector.extract_strided_slice %40 {offsets = [0, 1, 0], sizes = [1, 16, 128], strides = [1, 1, 1]} : vector<1x18x128xf32> to vector<1x16x128xf32>
    %43 = arith.addf %41, %42 : vector<1x16x128xf32>
    %44 = vector.extract_strided_slice %40 {offsets = [0, 2, 0], sizes = [1, 16, 128], strides = [1, 1, 1]} : vector<1x18x128xf32> to vector<1x16x128xf32>
    %45 = arith.addf %43, %44 : vector<1x16x128xf32>
    %46 = arith.mulf %1, %3 : vector<3x18x128xf32>
    %47 = vector.extract_strided_slice %46 {offsets = [0, 0, 0], sizes = [1, 18, 128], strides = [1, 1, 1]} : vector<3x18x128xf32> to vector<1x18x128xf32>
    %48 = vector.extract_strided_slice %46 {offsets = [1, 0, 0], sizes = [1, 18, 128], strides = [1, 1, 1]} : vector<3x18x128xf32> to vector<1x18x128xf32>
    %49 = arith.addf %47, %48 : vector<1x18x128xf32>
    %50 = vector.extract_strided_slice %46 {offsets = [2, 0, 0], sizes = [1, 18, 128], strides = [1, 1, 1]} : vector<3x18x128xf32> to vector<1x18x128xf32>
    %51 = arith.addf %49, %50 : vector<1x18x128xf32>
    %52 = vector.extract_strided_slice %51 {offsets = [0, 0, 0], sizes = [1, 16, 128], strides = [1, 1, 1]} : vector<1x18x128xf32> to vector<1x16x128xf32>
    %53 = vector.extract_strided_slice %51 {offsets = [0, 1, 0], sizes = [1, 16, 128], strides = [1, 1, 1]} : vector<1x18x128xf32> to vector<1x16x128xf32>
    %54 = arith.addf %52, %53 : vector<1x16x128xf32>
    %55 = vector.extract_strided_slice %51 {offsets = [0, 2, 0], sizes = [1, 16, 128], strides = [1, 1, 1]} : vector<1x18x128xf32> to vector<1x16x128xf32>
    %56 = arith.addf %54, %55 : vector<1x16x128xf32>
    %57 = arith.mulf %13, %23 : vector<1x16x128xf32>
    %58 = arith.mulf %13, %13 : vector<1x16x128xf32>
    %59 = arith.mulf %23, %23 : vector<1x16x128xf32>
    %cst = arith.constant 2.000000e+00 : f32
    %60 = vector.broadcast %cst : f32 to vector<1x16x128xf32>
    %61 = arith.mulf %60, %57 : vector<1x16x128xf32>
    %cst_7 = arith.constant 8.100000e-03 : f32
    %62 = vector.broadcast %cst_7 : f32 to vector<1x16x128xf32>
    %63 = arith.addf %61, %62 : vector<1x16x128xf32>
    %cst_8 = arith.constant 1.800000e+01 : f32
    %64 = vector.broadcast %cst_8 : f32 to vector<1x16x128xf32>
    %65 = arith.mulf %64, %56 : vector<1x16x128xf32>
    %cst_9 = arith.constant 2.000000e+00 : f32
    %66 = vector.broadcast %cst_9 : f32 to vector<1x16x128xf32>
    %67 = arith.mulf %66, %57 : vector<1x16x128xf32>
    %68 = arith.subf %65, %67 : vector<1x16x128xf32>
    %cst_10 = arith.constant 7.290000e-02 : f32
    %69 = vector.broadcast %cst_10 : f32 to vector<1x16x128xf32>
    %70 = arith.addf %68, %69 : vector<1x16x128xf32>
    %71 = arith.mulf %63, %70 : vector<1x16x128xf32>
    %72 = arith.addf %58, %59 : vector<1x16x128xf32>
    %cst_11 = arith.constant 8.100000e-03 : f32
    %73 = vector.broadcast %cst_11 : f32 to vector<1x16x128xf32>
    %74 = arith.addf %72, %73 : vector<1x16x128xf32>
    %75 = arith.addf %34, %45 : vector<1x16x128xf32>
    %cst_12 = arith.constant 9.000000e+00 : f32
    %76 = vector.broadcast %cst_12 : f32 to vector<1x16x128xf32>
    %77 = arith.mulf %76, %75 : vector<1x16x128xf32>
    %78 = arith.subf %77, %58 : vector<1x16x128xf32>
    %79 = arith.subf %78, %59 : vector<1x16x128xf32>
    %cst_13 = arith.constant 7.290000e-02 : f32
    %80 = vector.broadcast %cst_13 : f32 to vector<1x16x128xf32>
    %81 = arith.addf %79, %80 : vector<1x16x128xf32>
    %82 = arith.mulf %74, %81 : vector<1x16x128xf32>
    %cst_14 = arith.constant 5.000000e-01 : f32
    %83 = vector.broadcast %cst_14 : f32 to vector<1x16x128xf32>
    %84 = arith.mulf %83, %71 : vector<1x16x128xf32>
    %85 = tpu.reciprocal %82 : vector<1x16x128xf32> -> vector<1x16x128xf32>
    %86 = arith.mulf %84, %85 : vector<1x16x128xf32>
    %cst_15 = arith.constant 5.000000e-01 : f32
    %87 = vector.broadcast %cst_15 : f32 to vector<1x16x128xf32>
    %88 = arith.subf %87, %86 : vector<1x16x128xf32>
    %cst_16 = arith.constant 0.000000e+00 : f32
    %cst_17 = arith.constant 1.000000e+00 : f32
    %89 = vector.broadcast %cst_16 : f32 to vector<1x16x128xf32>
    %90 = arith.maximumf %89, %88 : vector<1x16x128xf32>
    %91 = vector.broadcast %cst_17 : f32 to vector<1x16x128xf32>
    %92 = arith.minimumf %91, %90 : vector<1x16x128xf32>
    %cst_18 = arith.constant dense<0.000000e+00> : vector<16x128xf32>
    %93 = vector.multi_reduction <add>, %92, %cst_18 [0] : vector<1x16x128xf32> to vector<16x128xf32>
    %cst_19 = arith.constant dense<0.000000e+00> : vector<128xf32>
    %94 = vector.multi_reduction <add>, %93, %cst_19 [0] : vector<16x128xf32> to vector<128xf32>
    %95 = vector.shape_cast %94 : vector<128xf32> to vector<1x128xf32>
    %96 = vector.shape_cast %95 : vector<1x128xf32> to vector<1x1x128xf32>
    %c0_20 = arith.constant 0 : index
    %c0_21 = arith.constant 0 : index
    %c0_22 = arith.constant 0 : index
    %97 = vector.load %arg3[%c0_20, %c0_21, %c0_22] : memref<1x1x128xf32, #tpu.memory_space<vmem>>, vector<1x1x128xf32>
    tpu.vector_store %arg3[%c0_20, %c0_21, %c0_22], %96 {strides = array<i32>} : memref<1x1x128xf32, #tpu.memory_space<vmem>>, vector<1x1x128xf32>,
    return
  }
  func.func @transform_0(%arg0: i32) -> (i32, i32, i32, i32) {
    %c0_i32 = arith.constant 0 : i32
    %c0_i32_0 = arith.constant 0 : i32
    %c0_i32_1 = arith.constant 0 : i32
    %c0_i32_2 = arith.constant 0 : i32
    return %arg0, %c0_i32, %c0_i32_0, %c0_i32_1 : i32, i32, i32, i32
  }
  func.func @transform_1(%arg0: i32) -> (i32, i32, i32, i32) {
    %c0_i32 = arith.constant 0 : i32
    %c0_i32_0 = arith.constant 0 : i32
    %c0_i32_1 = arith.constant 0 : i32
    %c0_i32_2 = arith.constant 0 : i32
    return %arg0, %c0_i32, %c0_i32_0, %c0_i32_1 : i32, i32, i32, i32
  }
  func.func @transform_2(%arg0: i32) -> (i32, i32, i32) {
    %c0_i32 = arith.constant 0 : i32
    %c0_i32_0 = arith.constant 0 : i32
    %c0_i32_1 = arith.constant 0 : i32
    return %arg0, %c0_i32, %c0_i32_0 : i32, i32, i32
  }
}

</mosaic_0001>

<llo_original>
// kernel: tpu_custom_call.1
$region0: #{tpu_custom_call.1}
  #allocation0 [shape = 'u32[]', space=smem, size = 0x4, offset = 0x4, fixed_abs, tag = 'smem constant byte address 0x4 - core index']
  #allocation1 [shape = 'u32[72,128]{1,0:T(1,128)}', space=vmem, size = 0x9000, scoped, tag = 'internal scratch']
  %s0 = inlined_call_operand.vmem [shape: f32[1,3,18,128], index: 0, kind: input, shape index: {}]
  %s1 = inlined_call_operand.vmem [shape: f32[1,3,18,128], index: 1, kind: input, shape index: {}]
  %s2 = inlined_call_operand.hbm [shape: f32[1,1,128], index: 2, kind: output, shape index: {}]
  %s3 = sld [smem:[#allocation0]]
  $region18: #{tpu_custom_call.1} parent=0
    _
  %s5 = ssub.s32 1, %s3
  %s6 = scalar_select 0, %s5, %s3
  $region1: #{tpu_custom_call.1} parent=0
    #allocation2 [shape = 'u8[512]{0}', space=vmem, size = 0x400, scoped, tag = 'output window, operand 0, single buffered']
    #allocation3 [shape = 's32[1]{0}', space=sflag, size = 0x4, scoped, tag = 'scoped memory for tpu_custom_call.1']
    %7 = vsyncpa [#allocation3], 0
    // Predicated region
    $region2: #{tpu_custom_call.1} parent=1 // pred_check
      _
    $region3: #{tpu_custom_call.1} parent=1 // pred_check_branch
      %9 = sbr.rel (0) target = $region5
    $region4: #{tpu_custom_call.1} parent=1 // pred_region
      _
    $region5: #{tpu_custom_call.1} parent=1 // pred_fallthru
      _
    // Predicated region
    $region6: #{tpu_custom_call.1} parent=1 // pred_check
      _
    $region7: #{tpu_custom_call.1} parent=1 // pred_check_branch
      %11 = sbr.rel (0) target = $region9
    $region8: #{tpu_custom_call.1} parent=1 // pred_region
      _
    $region9: #{tpu_custom_call.1} parent=1 // pred_fallthru
      _
    %v12 = vld [vmem:[%s0] sm:$0xff]
    %v13 = vld [vmem:[%s0 + $0x8] sm:$0xff]
    %v14 = vld [vmem:[%s0 + $0x10] sm:$0x3]
    %v15 = vld [vmem:[%s0 + $0x18] sm:$0xff]
    %v16 = vld [vmem:[%s0 + $0x20] sm:$0xff]
    %v17 = vld [vmem:[%s0 + $0x28] sm:$0x3]
    %v18 = vld [vmem:[%s0 + $0x30] sm:$0xff]
    %v19 = vld [vmem:[%s0 + $0x38] sm:$0xff]
    %v20 = vld [vmem:[%s0 + $0x40] sm:$0x3]
    %v21 = vld [vmem:[%s1] sm:$0xff]
    %v22 = vld [vmem:[%s1 + $0x8] sm:$0xff]
    %v23 = vld [vmem:[%s1 + $0x10] sm:$0x3]
    %v24 = vld [vmem:[%s1 + $0x18] sm:$0xff]
    %v25 = vld [vmem:[%s1 + $0x20] sm:$0xff]
    %v26 = vld [vmem:[%s1 + $0x28] sm:$0x3]
    %v27 = vld [vmem:[%s1 + $0x30] sm:$0xff]
    %v28 = vld [vmem:[%s1 + $0x38] sm:$0xff]
    %v29 = vld [vmem:[%s1 + $0x40] sm:$0x3]
    %v30 = vadd.f32 %v12, %v15
    %v31 = vadd.f32 %v13, %v16
    %v32 = vadd.f32 %v14, %v17
    %v33 = vadd.f32 %v30, %v18
    %v34 = vadd.f32 %v31, %v19
    %v35 = vadd.f32 %v32, %v20
    %vm39 = vcmask 1046528
    %v40 = vrot.slane %v33, 1
    %v41 = vrot.slane %v34, 1
    %v42 = vsel %vm39, %v40, %v41
    %v43 = vrot.slane %v35, 1
    %v44 = vsel %vm39, %v41, %v43
    %v47 = vadd.f32 %v33, %v42
    %v48 = vadd.f32 %v34, %v44
    %vm49 = vcmask 1045504
    %v50 = vrot.slane %v33, 2
    %v51 = vrot.slane %v34, 2
    %v52 = vsel %vm49, %v50, %v51
    %v53 = vrot.slane %v35, 2
    %v54 = vsel %vm49, %v51, %v53
    %v57 = vadd.f32 %v47, %v52
    %v58 = vadd.f32 %v48, %v54
    %v59 = vadd.f32 %v21, %v24
    %v60 = vadd.f32 %v22, %v25
    %v61 = vadd.f32 %v23, %v26
    %v62 = vadd.f32 %v59, %v27
    %v63 = vadd.f32 %v60, %v28
    %v64 = vadd.f32 %v61, %v29
    %v68 = vrot.slane %v62, 1
    %v69 = vrot.slane %v63, 1
    %v70 = vsel %vm39, %v68, %v69
    %v71 = vrot.slane %v64, 1
    %v72 = vsel %vm39, %v69, %v71
    %v75 = vadd.f32 %v62, %v70
    %v76 = vadd.f32 %v63, %v72
    %v77 = vrot.slane %v62, 2
    %v78 = vrot.slane %v63, 2
    %v79 = vsel %vm49, %v77, %v78
    %v80 = vrot.slane %v64, 2
    %v81 = vsel %vm49, %v78, %v80
    %v84 = vadd.f32 %v75, %v79
    %v85 = vadd.f32 %v76, %v81
    %v86 = vmul.f32 %v12, %v12
    %v87 = vmul.f32 %v13, %v13
    %v88 = vmul.f32 %v14, %v14
    %v89 = vmul.f32 %v15, %v15
    %v90 = vmul.f32 %v16, %v16
    %v91 = vmul.f32 %v17, %v17
    %v92 = vmul.f32 %v18, %v18
    %v93 = vmul.f32 %v19, %v19
    %v94 = vmul.f32 %v20, %v20
    %v95 = vadd.f32 %v86, %v89
    %v96 = vadd.f32 %v87, %v90
    %v97 = vadd.f32 %v88, %v91
    %v98 = vadd.f32 %v95, %v92
    %v99 = vadd.f32 %v96, %v93
    %v100 = vadd.f32 %v97, %v94
    %v104 = vrot.slane %v98, 1
    %v105 = vrot.slane %v99, 1
    %v106 = vsel %vm39, %v104, %v105
    %v107 = vrot.slane %v100, 1
    %v108 = vsel %vm39, %v105, %v107
    %v111 = vadd.f32 %v98, %v106
    %v112 = vadd.f32 %v99, %v108
    %v113 = vrot.slane %v98, 2
    %v114 = vrot.slane %v99, 2
    %v115 = vsel %vm49, %v113, %v114
    %v116 = vrot.slane %v100, 2
    %v117 = vsel %vm49, %v114, %v116
    %v120 = vadd.f32 %v111, %v115
    %v121 = vadd.f32 %v112, %v117
    %v122 = vmul.f32 %v21, %v21
    %v123 = vmul.f32 %v22, %v22
    %v124 = vmul.f32 %v23, %v23
    %v125 = vmul.f32 %v24, %v24
    %v126 = vmul.f32 %v25, %v25
    %v127 = vmul.f32 %v26, %v26
    %v128 = vmul.f32 %v27, %v27
    %v129 = vmul.f32 %v28, %v28
    %v130 = vmul.f32 %v29, %v29
    %v131 = vadd.f32 %v122, %v125
    %v132 = vadd.f32 %v123, %v126
    %v133 = vadd.f32 %v124, %v127
    %v134 = vadd.f32 %v131, %v128
    %v135 = vadd.f32 %v132, %v129
    %v136 = vadd.f32 %v133, %v130
    %v140 = vrot.slane %v134, 1
    %v141 = vrot.slane %v135, 1
    %v142 = vsel %vm39, %v140, %v141
    %v143 = vrot.slane %v136, 1
    %v144 = vsel %vm39, %v141, %v143
    %v147 = vadd.f32 %v134, %v142
    %v148 = vadd.f32 %v135, %v144
    %v149 = vrot.slane %v134, 2
    %v150 = vrot.slane %v135, 2
    %v151 = vsel %vm49, %v149, %v150
    %v152 = vrot.slane %v136, 2
    %v153 = vsel %vm49, %v150, %v152
    %v156 = vadd.f32 %v147, %v151
    %v157 = vadd.f32 %v148, %v153
    %v158 = vmul.f32 %v12, %v21
    %v159 = vmul.f32 %v13, %v22
    %v160 = vmul.f32 %v14, %v23
    %v161 = vmul.f32 %v15, %v24
    %v162 = vmul.f32 %v16, %v25
    %v163 = vmul.f32 %v17, %v26
    %v164 = vmul.f32 %v18, %v27
    %v165 = vmul.f32 %v19, %v28
    %v166 = vmul.f32 %v20, %v29
    %v167 = vadd.f32 %v158, %v161
    %v168 = vadd.f32 %v159, %v162
    %v169 = vadd.f32 %v160, %v163
    %v170 = vadd.f32 %v167, %v164
    %v171 = vadd.f32 %v168, %v165
    %v172 = vadd.f32 %v169, %v166
    %v176 = vrot.slane %v170, 1
    %v177 = vrot.slane %v171, 1
    %v178 = vsel %vm39, %v176, %v177
    %v179 = vrot.slane %v172, 1
    %v180 = vsel %vm39, %v177, %v179
    %v183 = vadd.f32 %v170, %v178
    %v184 = vadd.f32 %v171, %v180
    %v185 = vrot.slane %v170, 2
    %v186 = vrot.slane %v171, 2
    %v187 = vsel %vm49, %v185, %v186
    %v188 = vrot.slane %v172, 2
    %v189 = vsel %vm49, %v186, %v188
    %v192 = vadd.f32 %v183, %v187
    %v193 = vadd.f32 %v184, %v189
    %v194 = vmul.f32 %v57, %v84
    %v195 = vmul.f32 %v58, %v85
    %v196 = vmul.f32 %v57, %v57
    %v197 = vmul.f32 %v58, %v58
    %v198 = vmul.f32 %v84, %v84
    %v199 = vmul.f32 %v85, %v85
    %v200 = vmul.f32 %v194, 2.0
    %v201 = vmul.f32 %v195, 2.0
    %v202 = vadd.f32 %v200, 0.0081
    %v203 = vadd.f32 %v201, 0.0081
    %v204 = vmul.f32 %v192, 18.0
    %v205 = vmul.f32 %v193, 18.0
    %v206 = vsub.f32 %v204, %v200
    %v207 = vsub.f32 %v205, %v201
    %v208 = vadd.f32 %v206, 0.0729
    %v209 = vadd.f32 %v207, 0.0729
    %v210 = vmul.f32 %v202, %v208
    %v211 = vmul.f32 %v203, %v209
    %v212 = vadd.f32 %v196, %v198
    %v213 = vadd.f32 %v197, %v199
    %v214 = vadd.f32 %v212, 0.0081
    %v215 = vadd.f32 %v213, 0.0081
    %v216 = vadd.f32 %v120, %v156
    %v217 = vadd.f32 %v121, %v157
    %v218 = vmul.f32 %v216, 9.0
    %v219 = vmul.f32 %v217, 9.0
    %v220 = vsub.f32 %v218, %v196
    %v221 = vsub.f32 %v219, %v197
    %v222 = vsub.f32 %v220, %v198
    %v223 = vsub.f32 %v221, %v199
    %v224 = vadd.f32 %v222, 0.0729
    %v225 = vadd.f32 %v223, 0.0729
    %v226 = vmul.f32 %v214, %v224
    %v227 = vmul.f32 %v215, %v225
    %v228 = vmul.f32 %v210, 0.5
    %v229 = vmul.f32 %v211, 0.5
    %v230 = vrcp.pop %v226
    %v231 = vmul.f32 %v226, %v230
    %v232 = vsub.f32 1.0, %v231
    %v233 = vmul.f32 %v230, %v232
    %v234 = vadd.f32 %v230, %v233
    %vm235 = vweird.f32 %v226
    %vm236 = vweird.f32 %v230
    %vm237 = vmor %vm235, %vm236
    %v238 = vsel %vm237, %v230, %v234
    %v239 = vand.u32 2147483647, %v226
    %vm240 = vcmp.eq.f32.partialorder %v239, 8.507059e+37
    %v241 = vand.u32 %v226, 2147483648
    %v242 = vor.u32 1.1754944e-38, %v241
    %v243 = vsel %vm240, %v242, %v238
    %v244 = vrcp.pop %v227
    %v245 = vmul.f32 %v227, %v244
    %v246 = vsub.f32 1.0, %v245
    %v247 = vmul.f32 %v244, %v246
    %v248 = vadd.f32 %v244, %v247
    %vm249 = vweird.f32 %v227
    %vm250 = vweird.f32 %v244
    %vm251 = vmor %vm249, %vm250
    %v252 = vsel %vm251, %v244, %v248
    %v253 = vand.u32 2147483647, %v227
    %vm254 = vcmp.eq.f32.partialorder %v253, 8.507059e+37
    %v255 = vand.u32 %v227, 2147483648
    %v256 = vor.u32 1.1754944e-38, %v255
    %v257 = vsel %vm254, %v256, %v252
    %v258 = vmul.f32 %v228, %v243
    %v259 = vmul.f32 %v229, %v257
    %v260 = vsub.f32 0.5, %v258
    %v261 = vsub.f32 0.5, %v259
    %v262 = vmax.f32 %v260, 0.0
    %v263 = vmax.f32 %v261, 0.0
    %v264 = vmin.f32 %v262, 1.0
    %v265 = vmin.f32 %v263, 1.0
    %v266 = vadd.f32 %v264, 0.0
    %v267 = vadd.f32 %v265, 0.0
    %v268 = vadd.f32 %v266, %v267
    %v269 = vrot.slane %v268, 4
    %v270 = vadd.f32 %v268, %v269
    %v271 = vrot.slane %v270, 2
    %v272 = vadd.f32 %v270, %v271
    %v273 = vrot.slane %v272, 1
    %v274 = vadd.f32 %v272, %v273
    %275 = vst [vmem:[#allocation2] sm:$0x1] %v274
    // Predicated region
    $region10: #{tpu_custom_call.1} parent=1 // pred_check
      _
    $region11: #{tpu_custom_call.1} parent=1 // pred_check_branch
      %277 = sbr.rel (0) target = $region13
    $region12: #{tpu_custom_call.1} parent=1 // pred_region
      %279 = vsyncadd [#allocation3], 0
      %s281 = sshll.u32 [#allocation2], 4
      %s282 = int_to_ptr.vmem [resolvable:$true] %s281
      %s283 = sshll.u32 %s2, 4
      %s284 = int_to_ptr.hbm [resolvable:$true] %s283
      %286 = dma.vmem_to_hbm [thread:$0]  %s282, 16, %s284, [#allocation3]
    $region13: #{tpu_custom_call.1} parent=1 // pred_fallthru
      _
    // Predicated region
    $region14: #{tpu_custom_call.1} parent=1 // pred_check
      _
    $region15: #{tpu_custom_call.1} parent=1 // pred_check_branch
      %288 = sbr.rel (0) target = $region17
    $region16: #{tpu_custom_call.1} parent=1 // pred_region
      %290 = dma.done [#allocation3], 16
    $region17: #{tpu_custom_call.1} parent=1 // pred_fallthru
      _
    %291 = vsyncpa [#allocation3], 1

</llo_original>
